<compile_context>
chip_gen: v6e
topology: v6e:2x2x1
jax: 0.10.0
libtpu: 0.0.40
codegen_flags: <defaults>
</compile_context>

<pallas_src>
import jax
import jax.numpy as jnp
from jax.experimental import pallas as pl
from jax.experimental.pallas import tpu as pltpu


def _split_lane_dense_kernel(x0_ref, x1_ref, x2_ref, s0_ref, s1_ref, s2_ref):
    # Pure ref-to-ref copies: the channel selection is done by the BlockSpecs,
    # so every load/store is a full-lane, unmasked (N, H*W) tile.
    s0_ref[...] = x0_ref[...]
    s1_ref[...] = x1_ref[...]
    s2_ref[...] = x2_ref[...]


def _split_fallback_kernel(x_ref, s0_ref, s1_ref, s2_ref):
    # Fallback for H*W not a multiple of 128: full-array block, one grid step.
    x = x_ref[...]
    s0_ref[...] = x[:, 0:1, :, :]
    s1_ref[...] = x[:, 1:2, :, :]
    s2_ref[...] = x[:, 2:3, :, :]


def model_forward(x):
    """x: (N, 3, H, W). Returns (concatenated, (s0, s1, s2)) matching the PyTorch module."""
    N, C, H, W = x.shape
    assert C == 3, "split [1,1,1] along dim=1 requires 3 channels"
    HW = H * W

    # torch.cat(torch.split(x,[1,1,1],1),1) == x : return the input, do not
    # round-trip an identity copy through HBM.
    cat = x

    if HW % 128 == 0:
        # Free reshape for contiguous NCHW; channel c occupies columns [c*HW, (c+1)*HW).
        x_flat = x.reshape(N, C * HW)
        # Each input spec grabs one channel's lane-dense column block; the DMA does the split.
        in_specs = [
            pl.BlockSpec((N, HW), (lambda c: (lambda i: (0, c)))(c)) for c in range(C)
        ]
        out_spec = pl.BlockSpec((N, HW), lambda i: (0, 0))
        out_shape = jax.ShapeDtypeStruct((N, HW), x.dtype)
        # TODO(synk): for very large N*H*W, tile along batch / flattened spatial
        # (blocks that are multiples of (8,128)) to stay within scoped VMEM,
        # especially on v7x (64 MiB). Not needed at these sizes.
        s0, s1, s2 = pl.pallas_call(
            _split_lane_dense_kernel,
            out_shape=(out_shape, out_shape, out_shape),
            grid_spec=pltpu.PrefetchScalarGridSpec(
                num_scalar_prefetch=0,
                grid=(1,),  # whole batch in one step; payload is tiny vs per-step overhead
                in_specs=in_specs,
                out_specs=[out_spec, out_spec, out_spec],
            ),
            compiler_params=pltpu.CompilerParams(
                dimension_semantics=("arbitrary",)
            ),
        )(x_flat, x_flat, x_flat)
        splits = tuple(s.reshape(N, 1, H, W) for s in (s0, s1, s2))
    else:
        full_spec = pl.BlockSpec((N, C, H, W), lambda i: (0, 0, 0, 0))
        slice_spec = pl.BlockSpec((N, 1, H, W), lambda i: (0, 0, 0, 0))
        out_shape = jax.ShapeDtypeStruct((N, 1, H, W), x.dtype)
        splits = pl.pallas_call(
            _split_fallback_kernel,
            out_shape=(out_shape, out_shape, out_shape),
            grid_spec=pltpu.PrefetchScalarGridSpec(
                num_scalar_prefetch=0,
                grid=(1,),
                in_specs=[full_spec],
                out_specs=[slice_spec, slice_spec, slice_spec],
            ),
            compiler_params=pltpu.CompilerParams(
                dimension_semantics=("arbitrary",)
            ),
        )(x)
        splits = tuple(splits)

    return cat, splits


if __name__ == "__main__":
    key = jax.random.PRNGKey(0)
    k_x, k_w = jax.random.split(key)

    # Small shapes consistent with the forward: split [1,1,1] on dim=1 -> 3 channels.
    x = jax.random.normal(k_x, (2, 3, 16, 16), dtype=jnp.float32)

    # Deterministic init of the Conv2d(64, 10, 3, bias=False) weight.
    # TODO(synk): the conv weight is dead code — it is never used in the PyTorch forward().
    conv_weight = jax.random.normal(k_w, (10, 64, 3, 3), dtype=jnp.float32) * 0.02

    cat, splits = model_forward(x)
    jax.block_until_ready(cat)
    jax.block_until_ready(splits)

    # Correctness checks against the reference semantics.
    assert cat.shape == x.shape and jnp.allclose(cat, x)
    ref_splits = (x[:, 0:1], x[:, 1:2], x[:, 2:3])
    for got, ref in zip(splits, ref_splits):
        assert got.shape == ref.shape and jnp.allclose(got, ref)

    print("KERNEL_OK")
</pallas_src>

<mosaic_0001>
module attributes {stable_mosaic.version = 11 : i64} {
  func.func @_split_lane_dense_kernel(%arg0: i32, %arg1: memref<2x256xf32, #tpu.memory_space<vmem>>, %arg2: memref<2x256xf32, #tpu.memory_space<vmem>>, %arg3: memref<2x256xf32, #tpu.memory_space<vmem>>, %arg4: memref<2x256xf32, #tpu.memory_space<vmem>>, %arg5: memref<2x256xf32, #tpu.memory_space<vmem>>, %arg6: memref<2x256xf32, #tpu.memory_space<vmem>>) attributes {dimension_semantics = [#tpu.dimension_semantics<arbitrary>], iteration_bounds = array<i64: 1>, scalar_prefetch = 0 : i64, scratch_operands = 0 : i64, tpu.core_type = #tpu.core_type<tc>, window_params = [{transform_indices = @transform_0, window_bounds = array<i64: 2, 256>}, {transform_indices = @transform_1, window_bounds = array<i64: 2, 256>}, {transform_indices = @transform_2, window_bounds = array<i64: 2, 256>}, {pipeline_mode = #tpu.pipeline_mode<synchronous>, transform_indices = @transform_3, window_bounds = array<i64: 2, 256>}, {pipeline_mode = #tpu.pipeline_mode<synchronous>, transform_indices = @transform_4, window_bounds = array<i64: 2, 256>}, {pipeline_mode = #tpu.pipeline_mode<synchronous>, transform_indices = @transform_5, window_bounds = array<i64: 2, 256>}]} {
    %c0 = arith.constant 0 : index
    %c0_0 = arith.constant 0 : index
    %0 = vector.load %arg1[%c0, %c0_0] : memref<2x256xf32, #tpu.memory_space<vmem>>, vector<2x256xf32>
    %c0_1 = arith.constant 0 : index
    %c0_2 = arith.constant 0 : index
    %1 = vector.load %arg4[%c0_1, %c0_2] : memref<2x256xf32, #tpu.memory_space<vmem>>, vector<2x256xf32>
    tpu.vector_store %arg4[%c0_1, %c0_2], %0 {strides = array<i32>} : memref<2x256xf32, #tpu.memory_space<vmem>>, vector<2x256xf32>,
    %c0_3 = arith.constant 0 : index
    %c0_4 = arith.constant 0 : index
    %2 = vector.load %arg2[%c0_3, %c0_4] : memref<2x256xf32, #tpu.memory_space<vmem>>, vector<2x256xf32>
    %c0_5 = arith.constant 0 : index
    %c0_6 = arith.constant 0 : index
    %3 = vector.load %arg5[%c0_5, %c0_6] : memref<2x256xf32, #tpu.memory_space<vmem>>, vector<2x256xf32>
    tpu.vector_store %arg5[%c0_5, %c0_6], %2 {strides = array<i32>} : memref<2x256xf32, #tpu.memory_space<vmem>>, vector<2x256xf32>,
    %c0_7 = arith.constant 0 : index
    %c0_8 = arith.constant 0 : index
    %4 = vector.load %arg3[%c0_7, %c0_8] : memref<2x256xf32, #tpu.memory_space<vmem>>, vector<2x256xf32>
    %c0_9 = arith.constant 0 : index
    %c0_10 = arith.constant 0 : index
    %5 = vector.load %arg6[%c0_9, %c0_10] : memref<2x256xf32, #tpu.memory_space<vmem>>, vector<2x256xf32>
    tpu.vector_store %arg6[%c0_9, %c0_10], %4 {strides = array<i32>} : memref<2x256xf32, #tpu.memory_space<vmem>>, vector<2x256xf32>,
    return
  }
  func.func @transform_0(%arg0: i32) -> (i32, i32) {
    %c0_i32 = arith.constant 0 : i32
    %c0_i32_0 = arith.constant 0 : i32
    %c0_i32_1 = arith.constant 0 : i32
    return %c0_i32, %c0_i32_0 : i32, i32
  }
  func.func @transform_1(%arg0: i32) -> (i32, i32) {
    %c0_i32 = arith.constant 0 : i32
    %c1_i32 = arith.constant 1 : i32
    %c0_i32_0 = arith.constant 0 : i32
    return %c0_i32, %c1_i32 : i32, i32
  }
  func.func @transform_2(%arg0: i32) -> (i32, i32) {
    %c0_i32 = arith.constant 0 : i32
    %c2_i32 = arith.constant 2 : i32
    %c0_i32_0 = arith.constant 0 : i32
    return %c0_i32, %c2_i32 : i32, i32
  }
  func.func @transform_3(%arg0: i32) -> (i32, i32) {
    %c0_i32 = arith.constant 0 : i32
    %c0_i32_0 = arith.constant 0 : i32
    %c0_i32_1 = arith.constant 0 : i32
    return %c0_i32, %c0_i32_0 : i32, i32
  }
  func.func @transform_4(%arg0: i32) -> (i32, i32) {
    %c0_i32 = arith.constant 0 : i32
    %c0_i32_0 = arith.constant 0 : i32
    %c0_i32_1 = arith.constant 0 : i32
    return %c0_i32, %c0_i32_0 : i32, i32
  }
  func.func @transform_5(%arg0: i32) -> (i32, i32) {
    %c0_i32 = arith.constant 0 : i32
    %c0_i32_0 = arith.constant 0 : i32
    %c0_i32_1 = arith.constant 0 : i32
    return %c0_i32, %c0_i32_0 : i32, i32
  }
}

</mosaic_0001>

<llo_original>
// kernel: tpu_custom_call.1
$region0: #{tpu_custom_call.1}
  #allocation0 [shape = 'u32[]', space=smem, size = 0x4, offset = 0x4, fixed_abs, tag = 'smem constant byte address 0x4 - core index']
  #allocation1 [shape = 'u32[144,128]{1,0:T(1,128)}', space=vmem, size = 0x12000, scoped, tag = 'internal scratch']
  %s0 = inlined_call_operand.hbm [shape: f32[2,768], index: 0, kind: input, shape index: {}]
  %s1 = inlined_call_operand.hbm [shape: f32[2,768], index: 1, kind: input, shape index: {}]
  %s2 = inlined_call_operand.hbm [shape: f32[2,768], index: 2, kind: input, shape index: {}]
  %s3 = inlined_call_operand.hbm [shape: f32[2,256], index: 3, kind: output, shape index: {0}]
  %s4 = inlined_call_operand.hbm [shape: f32[2,256], index: 4, kind: output, shape index: {1}]
  %s5 = inlined_call_operand.hbm [shape: f32[2,256], index: 5, kind: output, shape index: {2}]
  %6 = xla_tuple %s3, %s4, %s5
  %s7 = sld [smem:[#allocation0]]
  $region50: #{tpu_custom_call.1} parent=0
    _
  %s9 = ssub.s32 1, %s7
  %s10 = scalar_select 0, %s9, %s7
  $region1: #{tpu_custom_call.1} parent=0
    #allocation2 [shape = 'u8[2048]{0}', space=vmem, size = 0x800, scoped, tag = 'input window, operand 0, single buffered']
    #allocation3 [shape = 's32[1]{0}', space=sflag, size = 0x4, scoped, tag = 'scoped memory for tpu_custom_call.1']
    #allocation4 [shape = 's32[1]{0}', space=sflag, size = 0x4, scoped, tag = 'scoped memory for tpu_custom_call.1']
    #allocation5 [shape = 'u8[2048]{0}', space=vmem, size = 0x800, scoped, tag = 'input window, operand 1, single buffered']
    #allocation6 [shape = 's32[1]{0}', space=sflag, size = 0x4, scoped, tag = 'scoped memory for tpu_custom_call.1']
    #allocation7 [shape = 'u8[2048]{0}', space=vmem, size = 0x800, scoped, tag = 'input window, operand 2, single buffered']
    #allocation8 [shape = 'u8[2048]{0}', space=vmem, size = 0x800, scoped, tag = 'output window, operand 0, single buffered']
    #allocation9 [shape = 'u8[2048]{0}', space=vmem, size = 0x800, scoped, tag = 'output window, operand 1, single buffered']
    #allocation10 [shape = 's32[1]{0}', space=sflag, size = 0x4, scoped, tag = 'scoped memory for tpu_custom_call.1']
    #allocation11 [shape = 'u8[2048]{0}', space=vmem, size = 0x800, scoped, tag = 'output window, operand 2, single buffered']
    %11 = vsyncpa [#allocation3], 0
    %12 = vsyncpa [#allocation6], 0
    %13 = vsyncpa [#allocation4], 0
    %14 = vsyncpa [#allocation10], 0
    // Predicated region
    $region2: #{tpu_custom_call.1} parent=1 // pred_check
      _
    $region3: #{tpu_custom_call.1} parent=1 // pred_check_branch
      %16 = sbr.rel (0) target = $region5
    $region4: #{tpu_custom_call.1} parent=1 // pred_region
      %s18 = ssub.s32 64, 64
      %19 = vsyncadd [#allocation3], %s18
      %s21 = sshll.u32 [#allocation2], 4
      %s22 = int_to_ptr.vmem [resolvable:$true] %s21
      %24 = dma.hbm_to_vmem [thread:$0]  %s0, 64, %s22, [#allocation3]
    $region5: #{tpu_custom_call.1} parent=1 // pred_fallthru
      _
    // Predicated region
    $region6: #{tpu_custom_call.1} parent=1 // pred_check
      _
    $region7: #{tpu_custom_call.1} parent=1 // pred_check_branch
      %26 = sbr.rel (0) target = $region9
    $region8: #{tpu_custom_call.1} parent=1 // pred_region
      %s28 = ssub.s32 64, 64
      %29 = vsyncadd [#allocation6], %s28
      %s30 = scalar_lea.hbm %s1, 64
      %s32 = sshll.u32 [#allocation5], 4
      %s33 = int_to_ptr.vmem [resolvable:$true] %s32
      %35 = dma.hbm_to_vmem [thread:$0]  %s30, 64, %s33, [#allocation6]
    $region9: #{tpu_custom_call.1} parent=1 // pred_fallthru
      _
    // Predicated region
    $region10: #{tpu_custom_call.1} parent=1 // pred_check
      _
    $region11: #{tpu_custom_call.1} parent=1 // pred_check_branch
      %37 = sbr.rel (0) target = $region13
    $region12: #{tpu_custom_call.1} parent=1 // pred_region
      %s39 = ssub.s32 64, 64
      %40 = vsyncadd [#allocation6], %s39
      %s41 = scalar_lea.hbm %s2, 128
      %s43 = sshll.u32 [#allocation7], 4
      %s44 = int_to_ptr.vmem [resolvable:$true] %s43
      %46 = dma.hbm_to_vmem [thread:$0]  %s41, 64, %s44, [#allocation6]
    $region13: #{tpu_custom_call.1} parent=1 // pred_fallthru
      _
    // Predicated region
    $region14: #{tpu_custom_call.1} parent=1 // pred_check
      _
    $region15: #{tpu_custom_call.1} parent=1 // pred_check_branch
      %48 = sbr.rel (0) target = $region17
    $region16: #{tpu_custom_call.1} parent=1 // pred_region
      %49 = dma.done [#allocation3], 64
    $region17: #{tpu_custom_call.1} parent=1 // pred_fallthru
      _
    // Predicated region
    $region18: #{tpu_custom_call.1} parent=1 // pred_check
      _
    $region19: #{tpu_custom_call.1} parent=1 // pred_check_branch
      %51 = sbr.rel (0) target = $region21
    $region20: #{tpu_custom_call.1} parent=1 // pred_region
      %52 = dma.done [#allocation6], 64
    $region21: #{tpu_custom_call.1} parent=1 // pred_fallthru
      _
    // Predicated region
    $region22: #{tpu_custom_call.1} parent=1 // pred_check
      _
    $region23: #{tpu_custom_call.1} parent=1 // pred_check_branch
      %54 = sbr.rel (0) target = $region25
    $region24: #{tpu_custom_call.1} parent=1 // pred_region
      %55 = dma.done [#allocation6], 64
    $region25: #{tpu_custom_call.1} parent=1 // pred_fallthru
      _
    %v56 = vld [vmem:[#allocation2] sm:$0xf]
    %57 = vst [vmem:[#allocation8] sm:$0xf] %v56
    %v58 = vld [vmem:[#allocation5] sm:$0xf]
    %59 = vst [vmem:[#allocation9] sm:$0xf] %v58
    %v60 = vld [vmem:[#allocation7] sm:$0xf]
    %61 = vst [vmem:[#allocation11] sm:$0xf] %v60
    // Predicated region
    $region26: #{tpu_custom_call.1} parent=1 // pred_check
      _
    $region27: #{tpu_custom_call.1} parent=1 // pred_check_branch
      %63 = sbr.rel (0) target = $region29
    $region28: #{tpu_custom_call.1} parent=1 // pred_region
      %s65 = ssub.s32 64, 64
      %66 = vsyncadd [#allocation4], %s65
      %s68 = sshll.u32 [#allocation8], 4
      %s69 = int_to_ptr.vmem [resolvable:$true] %s68
      %71 = dma.vmem_to_hbm [thread:$0]  %s69, 64, %s3, [#allocation4]
    $region29: #{tpu_custom_call.1} parent=1 // pred_fallthru
      _
    // Predicated region
    $region30: #{tpu_custom_call.1} parent=1 // pred_check
      _
    $region31: #{tpu_custom_call.1} parent=1 // pred_check_branch
      %73 = sbr.rel (0) target = $region33
    $region32: #{tpu_custom_call.1} parent=1 // pred_region
      %s75 = ssub.s32 64, 64
      %76 = vsyncadd [#allocation10], %s75
      %s78 = sshll.u32 [#allocation9], 4
      %s79 = int_to_ptr.vmem [resolvable:$true] %s78
      %81 = dma.vmem_to_hbm [thread:$0]  %s79, 64, %s4, [#allocation10]
    $region33: #{tpu_custom_call.1} parent=1 // pred_fallthru
      _
    // Predicated region
    $region34: #{tpu_custom_call.1} parent=1 // pred_check
      _
    $region35: #{tpu_custom_call.1} parent=1 // pred_check_branch
      %83 = sbr.rel (0) target = $region37
    $region36: #{tpu_custom_call.1} parent=1 // pred_region
      %s85 = ssub.s32 64, 64
      %86 = vsyncadd [#allocation10], %s85
      %s88 = sshll.u32 [#allocation11], 4
      %s89 = int_to_ptr.vmem [resolvable:$true] %s88
      %91 = dma.vmem_to_hbm [thread:$0]  %s89, 64, %s5, [#allocation10]
    $region37: #{tpu_custom_call.1} parent=1 // pred_fallthru
      _
    // Predicated region
    $region38: #{tpu_custom_call.1} parent=1 // pred_check
      _
    $region39: #{tpu_custom_call.1} parent=1 // pred_check_branch
      %93 = sbr.rel (0) target = $region41
    $region40: #{tpu_custom_call.1} parent=1 // pred_region
      %94 = dma.done [#allocation4], 64
    $region41: #{tpu_custom_call.1} parent=1 // pred_fallthru
      _
    // Predicated region
    $region42: #{tpu_custom_call.1} parent=1 // pred_check
      _
    $region43: #{tpu_custom_call.1} parent=1 // pred_check_branch
      %96 = sbr.rel (0) target = $region45
    $region44: #{tpu_custom_call.1} parent=1 // pred_region
      %97 = dma.done [#allocation10], 64
    $region45: #{tpu_custom_call.1} parent=1 // pred_fallthru
      _
    // Predicated region
    $region46: #{tpu_custom_call.1} parent=1 // pred_check
      _
    $region47: #{tpu_custom_call.1} parent=1 // pred_check_branch
      %99 = sbr.rel (0) target = $region49
    $region48: #{tpu_custom_call.1} parent=1 // pred_region
      %100 = dma.done [#allocation10], 64
    $region49: #{tpu_custom_call.1} parent=1 // pred_fallthru
      _
    %101 = vsyncpa [#allocation3], 1
    %102 = vsyncpa [#allocation6], 1
    %103 = vsyncpa [#allocation4], 1
    %104 = vsyncpa [#allocation10], 1

</llo_original>
